<compile_context>
chip_gen: v7x
topology: tpu7x:2x2x1
jax: 0.10.0
libtpu: 0.0.40
codegen_flags: <defaults>
</compile_context>

<pallas_src>
import functools
import math

import jax
import jax.numpy as jnp
from jax import lax
from jax.experimental import pallas as pl
from jax.experimental.pallas import tpu as pltpu

_EPS = 1e-12  # matches torch F.normalize default eps


def _arc_margin_kernel(x_ref, w_ref, o_ref, *, use_bf16):
    # x_ref: (B, D) full features block (resident every grid step, tiny).
    # w_ref: (TILE_N, D) weight tile.  o_ref: (B, TILE_N) output tile.
    x = x_ref[...].astype(jnp.float32)
    w = w_ref[...].astype(jnp.float32)

    # F.normalize(x, p=2, dim=1) == x / max(||x||, eps)
    #   rewritten as x * rsqrt(max(||x||^2, eps^2))  (rsqrt -> EUP slot,
    #   removes the full-tile VPU divide).  Zero-padded weight rows stay 0.
    x_ss = jnp.sum(x * x, axis=-1, keepdims=True)
    x_n = x * lax.rsqrt(jnp.maximum(x_ss, _EPS * _EPS))

    w_ss = jnp.sum(w * w, axis=-1, keepdims=True)
    w_n = w * lax.rsqrt(jnp.maximum(w_ss, _EPS * _EPS))

    if use_bf16:
        x_n = x_n.astype(jnp.bfloat16)
        w_n = w_n.astype(jnp.bfloat16)

    # F.linear(x_n, w_n) = x_n @ w_n.T, expressed as a direct contraction of
    # the last dims -> no materialized transpose of the weight tile.
    cosine = lax.dot_general(
        x_n, w_n,
        dimension_numbers=(((1,), (1,)), ((), ())),
        preferred_element_type=jnp.float32,
    )
    o_ref[...] = cosine.astype(o_ref.dtype)


def _choose_tile_n(n, d, b, itemsize=4, vmem_budget_bytes=36 * 1024 * 1024):
    """Largest power-of-two multiple of 128 TILE_N such that the
    double-buffered weight tile + double-buffered output tile + the resident
    (B, D) features block fit the VMEM budget."""
    best = 128
    tile = 128
    while True:
        need = (2 * tile * d * itemsize        # weight tile, double-buffered
                + 2 * b * tile * itemsize      # output tile, double-buffered
                + b * d * itemsize)            # features block
        if need > vmem_budget_bytes:
            break
        best = tile
        if tile >= n:
            break
        tile *= 2
    return best


def arc_margin_product(features: jax.Array,
                       weight: jax.Array,
                       *,
                       tile_n: int | None = None,
                       use_bf16_matmul: bool = False) -> jax.Array:
    """features: (B, in_features), weight: (out_features, in_features)
    -> cosine: (B, out_features), all float32."""
    B, D = features.shape
    N, D2 = weight.shape
    assert D == D2, "in_features mismatch"

    features = features.astype(jnp.float32)
    weight = weight.astype(jnp.float32)

    if tile_n is None:
        tile_n = _choose_tile_n(N, D, B)

    if N <= tile_n:
        # Single full-extent block along N (exact, no (…,128) constraint).
        tile_n = N
        n_pad = N
    else:
        # Pad N up to a multiple of TILE_N with zero rows (they normalize to
        # zero, produce zero cosines, and are sliced off below).
        n_pad = pl.cdiv(N, tile_n) * tile_n
        if n_pad != N:
            weight = jnp.pad(weight, ((0, n_pad - N), (0, 0)))

    grid = (n_pad // tile_n,)

    kernel = functools.partial(_arc_margin_kernel, use_bf16=use_bf16_matmul)

    out = pl.pallas_call(
        kernel,
        out_shape=jax.ShapeDtypeStruct((B, n_pad), jnp.float32),
        grid_spec=pltpu.PrefetchScalarGridSpec(
            num_scalar_prefetch=0,
            grid=grid,
            in_specs=[
                # Features: full (B, D) block, same for every tile (tiny).
                pl.BlockSpec((B, D), lambda j: (0, 0)),
                # Weight: stream (TILE_N, D) tiles along the class axis.
                pl.BlockSpec((tile_n, D), lambda j: (j, 0)),
            ],
            # Output: lane-dense (B, TILE_N) tile per grid step.
            out_specs=pl.BlockSpec((B, tile_n), lambda j: (0, j)),
        ),
        compiler_params=pltpu.CompilerParams(
            # Each output tile is independent (D is not tiled) -> parallel,
            # letting v7x split the N axis across its two TensorCores.
            dimension_semantics=("parallel",),
            vmem_limit_bytes=48 * 1024 * 1024,
        ),
    )(features, weight)

    if n_pad != N:
        out = out[:, :N]
    return out


def _reference(features, weight):
    xn = features / jnp.maximum(
        jnp.linalg.norm(features, axis=-1, keepdims=True), _EPS)
    wn = weight / jnp.maximum(
        jnp.linalg.norm(weight, axis=-1, keepdims=True), _EPS)
    return xn @ wn.T


if __name__ == "__main__":
    # Small, module-consistent shapes; tile_n forced below N to exercise the
    # tiled / pipelined path.
    batch = 8
    in_features = 128
    out_features = 512

    key = jax.random.PRNGKey(0)
    k_feat, k_w = jax.random.split(key)

    features = jax.random.normal(k_feat, (batch, in_features), dtype=jnp.float32)

    # Deterministic init mirroring reset_parameters(): uniform(-stdv, stdv).
    stdv = 1.0 / math.sqrt(in_features)
    weight = jax.random.uniform(
        k_w, (out_features, in_features), dtype=jnp.float32,
        minval=-stdv, maxval=stdv)

    cosine = arc_margin_product(features, weight, tile_n=256)
    cosine = jax.block_until_ready(cosine)

    # Sanity check against pure-JAX reference.
    ref = _reference(features, weight)
    assert cosine.shape == (batch, out_features)
    assert jnp.allclose(cosine, ref, atol=1e-4, rtol=1e-4), "mismatch vs reference"

    # Also check the single-block (N <= TILE_N) path with auto tile choice.
    cosine_auto = jax.block_until_ready(arc_margin_product(features, weight))
    assert jnp.allclose(cosine_auto, ref, atol=1e-4, rtol=1e-4), "mismatch (auto tile)"

    print("KERNEL_OK")
</pallas_src>

<mosaic_0001>
module attributes {stable_mosaic.version = 11 : i64} {
  func.func @_arc_margin_kernel(%arg0: i32, %arg1: memref<8x128xf32, #tpu.memory_space<vmem>>, %arg2: memref<256x128xf32, #tpu.memory_space<vmem>>, %arg3: memref<8x256xf32, #tpu.memory_space<vmem>>) attributes {dimension_semantics = [#tpu.dimension_semantics<parallel>], iteration_bounds = array<i64: 2>, scalar_prefetch = 0 : i64, scratch_operands = 0 : i64, tpu.core_type = #tpu.core_type<tc>, window_params = [{pipeline_mode = #tpu.pipeline_mode<synchronous>, transform_indices = @transform_0, window_bounds = array<i64: 8, 128>}, {transform_indices = @transform_1, window_bounds = array<i64: 256, 128>}, {transform_indices = @transform_2, window_bounds = array<i64: 8, 256>}]} {
    %c0 = arith.constant 0 : index
    %c0_0 = arith.constant 0 : index
    %0 = vector.load %arg1[%c0, %c0_0] : memref<8x128xf32, #tpu.memory_space<vmem>>, vector<8x128xf32>
    %c0_1 = arith.constant 0 : index
    %c0_2 = arith.constant 0 : index
    %1 = vector.load %arg2[%c0_1, %c0_2] : memref<256x128xf32, #tpu.memory_space<vmem>>, vector<256x128xf32>
    %2 = arith.mulf %0, %0 : vector<8x128xf32>
    %cst = arith.constant dense<0.000000e+00> : vector<8xf32>
    %3 = vector.multi_reduction <add>, %2, %cst [1] : vector<8x128xf32> to vector<8xf32>
    %4 = vector.shape_cast %3 : vector<8xf32> to vector<8x1xf32>
    %cst_3 = arith.constant 1.000000e-24 : f32
    %5 = vector.broadcast %cst_3 : f32 to vector<8x1xf32>
    %6 = arith.maximumf %4, %5 : vector<8x1xf32>
    %7 = math.rsqrt %6 : vector<8x1xf32>
    %8 = vector.broadcast %7 : vector<8x1xf32> to vector<8x128xf32>
    %9 = arith.mulf %0, %8 : vector<8x128xf32>
    %10 = arith.mulf %1, %1 : vector<256x128xf32>
    %cst_4 = arith.constant dense<0.000000e+00> : vector<256xf32>
    %11 = vector.multi_reduction <add>, %10, %cst_4 [1] : vector<256x128xf32> to vector<256xf32>
    %12 = vector.shape_cast %11 : vector<256xf32> to vector<256x1xf32>
    %cst_5 = arith.constant 1.000000e-24 : f32
    %13 = vector.broadcast %cst_5 : f32 to vector<256x1xf32>
    %14 = arith.maximumf %12, %13 : vector<256x1xf32>
    %15 = math.rsqrt %14 : vector<256x1xf32>
    %16 = vector.broadcast %15 : vector<256x1xf32> to vector<256x128xf32>
    %17 = arith.mulf %1, %16 : vector<256x128xf32>
    %cst_6 = arith.constant dense<0.000000e+00> : vector<8x256xf32>
    %18 = tpu.matmul %9, %17, %cst_6 {dimension_numbers = #tpu.dot_dimension_numbers<[1], [1], [0], [0], [0, 0, 1, 0], [], []>} : vector<8x128xf32>, vector<256x128xf32>, vector<8x256xf32> -> vector<8x256xf32>
    %c0_7 = arith.constant 0 : index
    %c0_8 = arith.constant 0 : index
    %19 = vector.load %arg3[%c0_7, %c0_8] : memref<8x256xf32, #tpu.memory_space<vmem>>, vector<8x256xf32>
    tpu.vector_store %arg3[%c0_7, %c0_8], %18 {strides = array<i32>} : memref<8x256xf32, #tpu.memory_space<vmem>>, vector<8x256xf32>,
    return
  }
  func.func @transform_0(%arg0: i32) -> (i32, i32) {
    %c0_i32 = arith.constant 0 : i32
    %c0_i32_0 = arith.constant 0 : i32
    %c0_i32_1 = arith.constant 0 : i32
    return %c0_i32, %c0_i32_0 : i32, i32
  }
  func.func @transform_1(%arg0: i32) -> (i32, i32) {
    %c0_i32 = arith.constant 0 : i32
    %c0_i32_0 = arith.constant 0 : i32
    return %arg0, %c0_i32 : i32, i32
  }
  func.func @transform_2(%arg0: i32) -> (i32, i32) {
    %c0_i32 = arith.constant 0 : i32
    %c0_i32_0 = arith.constant 0 : i32
    return %c0_i32, %arg0 : i32, i32
  }
}

</mosaic_0001>

<llo_original>
// kernel: tpu_custom_call.1
$region0: #{tpu_custom_call.1}
  #allocation0 [shape = 'u32[]', space=smem, size = 0x4, offset = 0x4, fixed_abs, tag = 'smem constant byte address 0x4 - core index']
  #allocation1 [shape = 'u32[144,128]{1,0:T(1,128)}', space=vmem, size = 0x12000, scoped, tag = 'internal scratch']
  %s0 = inlined_call_operand.hbm [shape: f32[8,128], index: 0, kind: input, shape index: {}]
  %s1 = inlined_call_operand.hbm [shape: f32[512,128], index: 1, kind: input, shape index: {}]
  %s2 = inlined_call_operand.hbm [shape: f32[8,512], index: 2, kind: output, shape index: {}]
  %s3 = sld [smem:[#allocation0]]
  $region49: #{tpu_custom_call.1} parent=0
    _
  %s5 = ssub.s32 1, %s3
  %s6 = scalar_select 0, %s5, %s3
  $region1: #{tpu_custom_call.1} parent=0
    #allocation2 [shape = 'u8[4096]{0}', space=vmem, size = 0x1000, scoped, tag = 'input window, operand 0, single buffered']
    #allocation3 [shape = 's32[2]{0}', space=sflag, size = 0x8, scoped, tag = 'scoped memory for tpu_custom_call.1']
    #allocation4 [shape = 's32[2]{0}', space=sflag, size = 0x8, scoped, tag = 'scoped memory for tpu_custom_call.1']
    #allocation5 [shape = 'u8[262144]{0}', space=vmem, size = 0x40000, scoped, tag = 'input window, operand 1']
    #allocation6 [shape = 's32[2]{0}', space=sflag, size = 0x8, scoped, tag = 'scoped memory for tpu_custom_call.1']
    #allocation7 [shape = 'u8[16384]{0}', space=vmem, size = 0x4000, scoped, tag = 'output window, operand 0']
    %7 = vsyncpa [#allocation3], 0
    %8 = vsyncpa [#allocation6], 0
    %s9 = scalar_lea.sflag [#allocation6], 1
    %10 = vsyncpa %s9, 0
    %11 = vsyncpa [#allocation4], 0
    %s12 = scalar_lea.sflag [#allocation4], 1
    %13 = vsyncpa %s12, 0
    loop: start=0, step=1, limit=4
    $region2: #{tpu_custom_call.1} parent=1 // loop_pre_header
      _
    $region3: #{tpu_custom_call.1} parent=1 // loop_header
      %s15 = sphi 0, %s19
      %p16 = scmp.ge.s32.totalorder %s15, 4
      %s23 = sphi 0, %s23
      %s25 = sphi 0, %s23
      %s26 = sphi 0, %s25
      %s40 = sphi 0, %s26
      %s46 = sphi 0, %s48
      %s49 = sphi 0, %s46
      %s50 = sphi 0, %s49
      %s66 = sphi 0, %s50
      %s72 = sphi 0, %s74
      %s75 = sphi 0, %s72
      %s76 = sphi 0, %s75
      %s92 = sphi 0, %s76
    $region4: #{tpu_custom_call.1} parent=1 // loop_header_branch
      %18 = sbr.rel (%p16) target = $region8
    $region5: #{tpu_custom_call.1} parent=1 // loop_body
      %s20 = ssub.s32 %s15, 1
      %s21 = ssub.s32 %s15, 2
      %s22 = sadd.s32 %s15, 1
      %s24 = sadd.s32 %s23, 1
      %p27 = scmp.eq.s32.totalorder %s15, 1
      %p28 = scmp.ne.s32.totalorder %s23, %s25
      %p29 = scmp.eq.s32.totalorder %s15, 0
      %p30 = por %p28, %p29
      %p31 = scmp.ne.s32.totalorder %s23, %s25
      %p32 = scmp.eq.s32.totalorder %s20, 1
      %p33 = por %p31, %p32
      %p34 = scmp.ne.s32.totalorder %s25, %s26
      %p35 = scmp.eq.s32.totalorder %s20, 0
      %p36 = por %p34, %p35
      %p37 = scmp.ne.s32.totalorder %s25, %s26
      %p38 = scmp.eq.s32.totalorder %s21, 1
      %p39 = por %p37, %p38
      %p41 = scmp.ne.s32.totalorder %s26, %s40
      %p42 = scmp.eq.s32.totalorder %s21, 0
      %p43 = por %p41, %p42
      %s44 = ssub.s32 %s15, %s22
      %p45 = scmp.eq.s32.totalorder %s44, 0
      %s47 = sadd.s32 %s46, 1
      %s48 = scalar_select %p45, %s46, %s47
      %p51 = pneg %p45
      %p52 = scmp.eq.s32.totalorder %s15, 1
      %p53 = por %p51, %p52
      %p54 = scmp.ne.s32.totalorder %s46, %s49
      %p55 = scmp.eq.s32.totalorder %s15, 0
      %p56 = por %p54, %p55
      %p57 = scmp.ne.s32.totalorder %s46, %s49
      %p58 = scmp.eq.s32.totalorder %s20, 1
      %p59 = por %p57, %p58
      %p60 = scmp.ne.s32.totalorder %s49, %s50
      %p61 = scmp.eq.s32.totalorder %s20, 0
      %p62 = por %p60, %p61
      %p63 = scmp.ne.s32.totalorder %s49, %s50
      %p64 = scmp.eq.s32.totalorder %s21, 1
      %p65 = por %p63, %p64
      %p67 = scmp.ne.s32.totalorder %s50, %s66
      %p68 = scmp.eq.s32.totalorder %s21, 0
      %p69 = por %p67, %p68
      %s70 = ssub.s32 %s15, %s22
      %p71 = scmp.eq.s32.totalorder %s70, 0
      %s73 = sadd.s32 %s72, 1
      %s74 = scalar_select %p71, %s72, %s73
      %p77 = pneg %p71
      %p78 = scmp.eq.s32.totalorder %s15, 1
      %p79 = por %p77, %p78
      %p80 = scmp.ne.s32.totalorder %s72, %s75
      %p81 = scmp.eq.s32.totalorder %s15, 0
      %p82 = por %p80, %p81
      %p83 = scmp.ne.s32.totalorder %s72, %s75
      %p84 = scmp.eq.s32.totalorder %s20, 1
      %p85 = por %p83, %p84
      %p86 = scmp.ne.s32.totalorder %s75, %s76
      %p87 = scmp.eq.s32.totalorder %s20, 0
      %p88 = por %p86, %p87
      %p89 = scmp.ne.s32.totalorder %s75, %s76
      %p90 = scmp.eq.s32.totalorder %s21, 1
      %p91 = por %p89, %p90
      %p93 = scmp.ne.s32.totalorder %s76, %s92
      %p94 = scmp.eq.s32.totalorder %s21, 0
      %p95 = por %p93, %p94
      %p96 = scmp.le.s32.totalorder 1, %s15
      %p97 = scmp.lt.s32.totalorder %s15, 3
      %p98 = pnand %p96, %p97
      %p99 = pneg %p98
      // Predicated region
      $region9: #{tpu_custom_call.1} parent=5 // pred_check
        _
      $region10: #{tpu_custom_call.1} parent=5 // pred_check_branch
        %101 = sbr.rel (%p98) target = $region12
      $region11: #{tpu_custom_call.1} parent=5 // pred_region
        %s102 = ssub.s32 %s15, 1
        // Predicated region
        $region13: #{tpu_custom_call.1} parent=11 // pred_check
          %p103 = pneg %p36
        $region14: #{tpu_custom_call.1} parent=11 // pred_check_branch
          %105 = sbr.rel (%p103) target = $region16
        $region15: #{tpu_custom_call.1} parent=11 // pred_region
          %s107 = ssub.s32 128, 128
          %108 = vsyncadd [#allocation3], %s107
          %s110 = sshll.u32 [#allocation2], 4
          %s111 = int_to_ptr.vmem [resolvable:$true] %s110
          %113 = dma.hbm_to_vmem [thread:$0]  %s0, 128, %s111, [#allocation3]
        $region16: #{tpu_custom_call.1} parent=11 // pred_fallthru
          _
      $region12: #{tpu_custom_call.1} parent=5 // pred_fallthru
        _
      %p114 = scmp.lt.s32.totalorder %s15, 2
      // Predicated region
      $region17: #{tpu_custom_call.1} parent=5 // pred_check
        %p115 = pneg %p114
      $region18: #{tpu_custom_call.1} parent=5 // pred_check_branch
        %117 = sbr.rel (%p115) target = $region20
      $region19: #{tpu_custom_call.1} parent=5 // pred_region
        // Predicated region
        $region21: #{tpu_custom_call.1} parent=19 // pred_check
          %p118 = pneg %p56
        $region22: #{tpu_custom_call.1} parent=19 // pred_check_branch
          %120 = sbr.rel (%p118) target = $region24
        $region23: #{tpu_custom_call.1} parent=19 // pred_region
          %s121 = sand.u32 %s46, 1
          %s122 = scalar_lea.sflag [#allocation6], %s121
          %s123 = sand.u32 %s46, 1
          %s124 = smul.addr %s123, 256
          %s125 = scalar_lea.vmem [#allocation5], %s124
          %s126 = smul.u32 32, %s15
          %s128 = ssub.s32 4096, 4096
          %129 = vsyncadd %s122, %s128
          %s130 = smul.addr %s126, 128
          %s131 = scalar_lea.hbm %s1, %s130
          %s132 = sshll.u32 %s125, 4
          %s133 = int_to_ptr.vmem [resolvable:$true] %s132
          %138 = dma.hbm_to_vmem [thread:$0]  %s131, 4096, %s133, %s122, 128, 128, 8
        $region24: #{tpu_custom_call.1} parent=19 // pred_fallthru
          _
      $region20: #{tpu_custom_call.1} parent=5 // pred_fallthru
        _
      %p139 = scmp.le.s32.totalorder 1, %s15
      %p140 = scmp.lt.s32.totalorder %s15, 3
      %p141 = pnand %p139, %p140
      %p142 = pneg %p141
      // Predicated region
      $region25: #{tpu_custom_call.1} parent=5 // pred_check
        _
      $region26: #{tpu_custom_call.1} parent=5 // pred_check_branch
        %144 = sbr.rel (%p141) target = $region28
      $region27: #{tpu_custom_call.1} parent=5 // pred_region
        %s145 = ssub.s32 %s15, 1
        // Predicated region
        $region29: #{tpu_custom_call.1} parent=27 // pred_check
          %p146 = pneg %p36
        $region30: #{tpu_custom_call.1} parent=27 // pred_check_branch
          %148 = sbr.rel (%p146) target = $region32
        $region31: #{tpu_custom_call.1} parent=27 // pred_region
          %149 = dma.done [#allocation3], 128
        $region32: #{tpu_custom_call.1} parent=27 // pred_fallthru
          _
        %s150 = sand.u32 %s49, 1
        %s151 = scalar_lea.sflag [#allocation6], %s150
        %s152 = sand.u32 %s49, 1
        %s153 = smul.addr %s152, 256
        %s154 = scalar_lea.vmem [#allocation5], %s153
        // Predicated region
        $region33: #{tpu_custom_call.1} parent=27 // pred_check
          %p155 = pneg %p62
        $region34: #{tpu_custom_call.1} parent=27 // pred_check_branch
          %157 = sbr.rel (%p155) target = $region36
        $region35: #{tpu_custom_call.1} parent=27 // pred_region
          %158 = dma.done %s151, 4096
        $region36: #{tpu_custom_call.1} parent=27 // pred_fallthru
          _
        %p159 = pneg %p36
        %p160 = pneg %p33
        %s161 = sand.u32 %s49, 1
        %s162 = scalar_lea.sflag [#allocation6], %s161
        %s163 = sand.u32 %s49, 1
        %s164 = smul.addr %s163, 256
        %s165 = scalar_lea.vmem [#allocation5], %s164
        %p166 = pneg %p62
        %p167 = pneg %p59
        %p168 = pneg %p88
        %p169 = pneg %p85
        %s170 = sand.u32 %s75, 1
        %s171 = scalar_lea.sflag [#allocation4], %s170
        %s172 = sand.u32 %s75, 1
        %s173 = smul.addr %s172, 16
        %s174 = scalar_lea.vmem [#allocation7], %s173
        %s175 = smul.u32 32, %s20
        %s176 = smul.u32 2, %s20
        %v177 = vld [vmem:[#allocation2] sm:$0xff]
        %v178 = vld [vmem:[%s154] sm:$0xff]
        %v179 = vld [vmem:[%s154 + $0x8] sm:$0xff]
        %v180 = vld [vmem:[%s154 + $0x10] sm:$0xff]
        %v181 = vld [vmem:[%s154 + $0x18] sm:$0xff]
        %v182 = vld [vmem:[%s154 + $0x20] sm:$0xff]
        %v183 = vld [vmem:[%s154 + $0x28] sm:$0xff]
        %v184 = vld [vmem:[%s154 + $0x30] sm:$0xff]
        %v185 = vld [vmem:[%s154 + $0x38] sm:$0xff]
        %v186 = vld [vmem:[%s154 + $0x40] sm:$0xff]
        %v187 = vld [vmem:[%s154 + $0x48] sm:$0xff]
        %v188 = vld [vmem:[%s154 + $0x50] sm:$0xff]
        %v189 = vld [vmem:[%s154 + $0x58] sm:$0xff]
        %v190 = vld [vmem:[%s154 + $0x60] sm:$0xff]
        %v191 = vld [vmem:[%s154 + $0x68] sm:$0xff]
        %v192 = vld [vmem:[%s154 + $0x70] sm:$0xff]
        %v193 = vld [vmem:[%s154 + $0x78] sm:$0xff]
        %v194 = vld [vmem:[%s154 + $0x80] sm:$0xff]
        %v195 = vld [vmem:[%s154 + $0x88] sm:$0xff]
        %v196 = vld [vmem:[%s154 + $0x90] sm:$0xff]
        %v197 = vld [vmem:[%s154 + $0x98] sm:$0xff]
        %v198 = vld [vmem:[%s154 + $0xa0] sm:$0xff]
        %v199 = vld [vmem:[%s154 + $0xa8] sm:$0xff]
        %v200 = vld [vmem:[%s154 + $0xb0] sm:$0xff]
        %v201 = vld [vmem:[%s154 + $0xb8] sm:$0xff]
        %v202 = vld [vmem:[%s154 + $0xc0] sm:$0xff]
        %v203 = vld [vmem:[%s154 + $0xc8] sm:$0xff]
        %v204 = vld [vmem:[%s154 + $0xd0] sm:$0xff]
        %v205 = vld [vmem:[%s154 + $0xd8] sm:$0xff]
        %v206 = vld [vmem:[%s154 + $0xe0] sm:$0xff]
        %v207 = vld [vmem:[%s154 + $0xe8] sm:$0xff]
        %v208 = vld [vmem:[%s154 + $0xf0] sm:$0xff]
        %v209 = vld [vmem:[%s154 + $0xf8] sm:$0xff]
        %v210 = vmul.f32 %v177, %v177
        %211 = vadd.xlane.f32.xlu0 %v210
        %v212 = vpop.xlane.xlu0 %211
        %v213 = vmax.f32 %v212, 1e-24
        %v214 = vrsqrt.pop %v213
        %v215 = vmul.f32 %v177, %v214
        %v216 = vmul.f32 %v178, %v178
        %v217 = vmul.f32 %v179, %v179
        %v218 = vmul.f32 %v180, %v180
        %v219 = vmul.f32 %v181, %v181
        %v220 = vmul.f32 %v182, %v182
        %v221 = vmul.f32 %v183, %v183
        %v222 = vmul.f32 %v184, %v184
        %v223 = vmul.f32 %v185, %v185
        %v224 = vmul.f32 %v186, %v186
        %v225 = vmul.f32 %v187, %v187
        %v226 = vmul.f32 %v188, %v188
        %v227 = vmul.f32 %v189, %v189
        %v228 = vmul.f32 %v190, %v190
        %v229 = vmul.f32 %v191, %v191
        %v230 = vmul.f32 %v192, %v192
        %v231 = vmul.f32 %v193, %v193
        %v232 = vmul.f32 %v194, %v194
        %v233 = vmul.f32 %v195, %v195
        %v234 = vmul.f32 %v196, %v196
        %v235 = vmul.f32 %v197, %v197
        %v236 = vmul.f32 %v198, %v198
        %v237 = vmul.f32 %v199, %v199
        %v238 = vmul.f32 %v200, %v200
        %v239 = vmul.f32 %v201, %v201
        %v240 = vmul.f32 %v202, %v202
        %v241 = vmul.f32 %v203, %v203
        %v242 = vmul.f32 %v204, %v204
        %v243 = vmul.f32 %v205, %v205
        %v244 = vmul.f32 %v206, %v206
        %v245 = vmul.f32 %v207, %v207
        %v246 = vmul.f32 %v208, %v208
        %v247 = vmul.f32 %v209, %v209
        %248 = vadd.xlane.f32.xlu0 %v216
        %v249 = vpop.xlane.xlu0 %248
        %250 = vadd.xlane.f32.xlu0 %v217
        %v251 = vpop.xlane.xlu0 %250
        %252 = vadd.xlane.f32.xlu0 %v218
        %v253 = vpop.xlane.xlu0 %252
        %254 = vadd.xlane.f32.xlu0 %v219
        %v255 = vpop.xlane.xlu0 %254
        %256 = vadd.xlane.f32.xlu0 %v220
        %v257 = vpop.xlane.xlu0 %256
        %258 = vadd.xlane.f32.xlu0 %v221
        %v259 = vpop.xlane.xlu0 %258
        %260 = vadd.xlane.f32.xlu0 %v222
        %v261 = vpop.xlane.xlu0 %260
        %262 = vadd.xlane.f32.xlu0 %v223
        %v263 = vpop.xlane.xlu0 %262
        %264 = vadd.xlane.f32.xlu0 %v224
        %v265 = vpop.xlane.xlu0 %264
        %266 = vadd.xlane.f32.xlu0 %v225
        %v267 = vpop.xlane.xlu0 %266
        %268 = vadd.xlane.f32.xlu0 %v226
        %v269 = vpop.xlane.xlu0 %268
        %270 = vadd.xlane.f32.xlu0 %v227
        %v271 = vpop.xlane.xlu0 %270
        %272 = vadd.xlane.f32.xlu0 %v228
        %v273 = vpop.xlane.xlu0 %272
        %274 = vadd.xlane.f32.xlu0 %v229
        %v275 = vpop.xlane.xlu0 %274
        %276 = vadd.xlane.f32.xlu0 %v230
        %v277 = vpop.xlane.xlu0 %276
        %278 = vadd.xlane.f32.xlu0 %v231
        %v279 = vpop.xlane.xlu0 %278
        %280 = vadd.xlane.f32.xlu0 %v232
        %v281 = vpop.xlane.xlu0 %280
        %282 = vadd.xlane.f32.xlu0 %v233
        %v283 = vpop.xlane.xlu0 %282
        %284 = vadd.xlane.f32.xlu0 %v234
        %v285 = vpop.xlane.xlu0 %284
        %286 = vadd.xlane.f32.xlu0 %v235
        %v287 = vpop.xlane.xlu0 %286
        %288 = vadd.xlane.f32.xlu0 %v236
        %v289 = vpop.xlane.xlu0 %288
        %290 = vadd.xlane.f32.xlu0 %v237
        %v291 = vpop.xlane.xlu0 %290
        %292 = vadd.xlane.f32.xlu0 %v238
        %v293 = vpop.xlane.xlu0 %292
        %294 = vadd.xlane.f32.xlu0 %v239
        %v295 = vpop.xlane.xlu0 %294
        %296 = vadd.xlane.f32.xlu0 %v240
        %v297 = vpop.xlane.xlu0 %296
        %298 = vadd.xlane.f32.xlu0 %v241
        %v299 = vpop.xlane.xlu0 %298
        %300 = vadd.xlane.f32.xlu0 %v242
        %v301 = vpop.xlane.xlu0 %300
        %302 = vadd.xlane.f32.xlu0 %v243
        %v303 = vpop.xlane.xlu0 %302
        %304 = vadd.xlane.f32.xlu0 %v244
        %v305 = vpop.xlane.xlu0 %304
        %306 = vadd.xlane.f32.xlu0 %v245
        %v307 = vpop.xlane.xlu0 %306
        %308 = vadd.xlane.f32.xlu0 %v246
        %v309 = vpop.xlane.xlu0 %308
        %310 = vadd.xlane.f32.xlu0 %v247
        %v311 = vpop.xlane.xlu0 %310
        %v312 = vmax.f32 %v249, 1e-24
        %v313 = vmax.f32 %v251, 1e-24
        %v314 = vmax.f32 %v253, 1e-24
        %v315 = vmax.f32 %v255, 1e-24
        %v316 = vmax.f32 %v257, 1e-24
        %v317 = vmax.f32 %v259, 1e-24
        %v318 = vmax.f32 %v261, 1e-24
        %v319 = vmax.f32 %v263, 1e-24
        %v320 = vmax.f32 %v265, 1e-24
        %v321 = vmax.f32 %v267, 1e-24
        %v322 = vmax.f32 %v269, 1e-24
        %v323 = vmax.f32 %v271, 1e-24
        %v324 = vmax.f32 %v273, 1e-24
        %v325 = vmax.f32 %v275, 1e-24
        %v326 = vmax.f32 %v277, 1e-24
        %v327 = vmax.f32 %v279, 1e-24
        %v328 = vmax.f32 %v281, 1e-24
        %v329 = vmax.f32 %v283, 1e-24
        %v330 = vmax.f32 %v285, 1e-24
        %v331 = vmax.f32 %v287, 1e-24
        %v332 = vmax.f32 %v289, 1e-24
        %v333 = vmax.f32 %v291, 1e-24
        %v334 = vmax.f32 %v293, 1e-24
        %v335 = vmax.f32 %v295, 1e-24
        %v336 = vmax.f32 %v297, 1e-24
        %v337 = vmax.f32 %v299, 1e-24
        %v338 = vmax.f32 %v301, 1e-24
        %v339 = vmax.f32 %v303, 1e-24
        %v340 = vmax.f32 %v305, 1e-24
        %v341 = vmax.f32 %v307, 1e-24
        %v342 = vmax.f32 %v309, 1e-24
        %v343 = vmax.f32 %v311, 1e-24
        %v344 = vrsqrt.pop %v312
        %v345 = vrsqrt.pop %v313
        %v346 = vrsqrt.pop %v314
        %v347 = vrsqrt.pop %v315
        %v348 = vrsqrt.pop %v316
        %v349 = vrsqrt.pop %v317
        %v350 = vrsqrt.pop %v318
        %v351 = vrsqrt.pop %v319
        %v352 = vrsqrt.pop %v320
        %v353 = vrsqrt.pop %v321
        %v354 = vrsqrt.pop %v322
        %v355 = vrsqrt.pop %v323
        %v356 = vrsqrt.pop %v324
        %v357 = vrsqrt.pop %v325
        %v358 = vrsqrt.pop %v326
        %v359 = vrsqrt.pop %v327
        %v360 = vrsqrt.pop %v328
        %v361 = vrsqrt.pop %v329
        %v362 = vrsqrt.pop %v330
        %v363 = vrsqrt.pop %v331
        %v364 = vrsqrt.pop %v332
        %v365 = vrsqrt.pop %v333
        %v366 = vrsqrt.pop %v334
        %v367 = vrsqrt.pop %v335
        %v368 = vrsqrt.pop %v336
        %v369 = vrsqrt.pop %v337
        %v370 = vrsqrt.pop %v338
        %v371 = vrsqrt.pop %v339
        %v372 = vrsqrt.pop %v340
        %v373 = vrsqrt.pop %v341
        %v374 = vrsqrt.pop %v342
        %v375 = vrsqrt.pop %v343
        %v376 = vmul.f32 %v178, %v344
        %v377 = vmul.f32 %v179, %v345
        %v378 = vmul.f32 %v180, %v346
        %v379 = vmul.f32 %v181, %v347
        %v380 = vmul.f32 %v182, %v348
        %v381 = vmul.f32 %v183, %v349
        %v382 = vmul.f32 %v184, %v350
        %v383 = vmul.f32 %v185, %v351
        %v384 = vmul.f32 %v186, %v352
        %v385 = vmul.f32 %v187, %v353
        %v386 = vmul.f32 %v188, %v354
        %v387 = vmul.f32 %v189, %v355
        %v388 = vmul.f32 %v190, %v356
        %v389 = vmul.f32 %v191, %v357
        %v390 = vmul.f32 %v192, %v358
        %v391 = vmul.f32 %v193, %v359
        %v392 = vmul.f32 %v194, %v360
        %v393 = vmul.f32 %v195, %v361
        %v394 = vmul.f32 %v196, %v362
        %v395 = vmul.f32 %v197, %v363
        %v396 = vmul.f32 %v198, %v364
        %v397 = vmul.f32 %v199, %v365
        %v398 = vmul.f32 %v200, %v366
        %v399 = vmul.f32 %v201, %v367
        %v400 = vmul.f32 %v202, %v368
        %v401 = vmul.f32 %v203, %v369
        %v402 = vmul.f32 %v204, %v370
        %v403 = vmul.f32 %v205, %v371
        %v404 = vmul.f32 %v206, %v372
        %v405 = vmul.f32 %v207, %v373
        %v406 = vmul.f32 %v208, %v374
        %v407 = vmul.f32 %v209, %v375
        %408 = vmatprep.subr.mxu0 0.0
        %409 = vmatpush1.xpose.msra.mxu0 %v376
        %410 = vmatprep.subr.mxu0 0.0
        %411 = vmatpush1.xpose.msra.mxu0 %v377
        %412 = vmatprep.subr.mxu0 0.0
        %413 = vmatpush1.xpose.msra.mxu0 %v378
        %414 = vmatprep.subr.mxu0 0.0
        %415 = vmatpush1.xpose.msra.mxu0 %v379
        %416 = vmatprep.subr.mxu0 0.0
        %417 = vmatpush1.xpose.msra.mxu0 %v380
        %418 = vmatprep.subr.mxu0 0.0
        %419 = vmatpush1.xpose.msra.mxu0 %v381
        %420 = vmatprep.subr.mxu0 0.0
        %421 = vmatpush1.xpose.msra.mxu0 %v382
        %422 = vmatprep.subr.mxu0 0.0
        %423 = vmatpush1.xpose.msra.mxu0 %v383
        %424 = vmatprep.subr.mxu0 0.0
        %425 = vmatpush1.xpose.msra.mxu0 %v384
        %426 = vmatprep.subr.mxu0 0.0
        %427 = vmatpush1.xpose.msra.mxu0 %v385
        %428 = vmatprep.subr.mxu0 0.0
        %429 = vmatpush1.xpose.msra.mxu0 %v386
        %430 = vmatprep.subr.mxu0 0.0
        %431 = vmatpush1.xpose.msra.mxu0 %v387
        %432 = vmatprep.subr.mxu0 0.0
        %433 = vmatpush1.xpose.msra.mxu0 %v388
        %434 = vmatprep.subr.mxu0 0.0
        %435 = vmatpush1.xpose.msra.mxu0 %v389
        %436 = vmatprep.subr.mxu0 0.0
        %437 = vmatpush1.xpose.msra.mxu0 %v390
        %438 = vmatprep.subr.mxu0 0.0
        %439 = vmatpush1.xpose.msra.mxu0 %v391
        %440 = vmatprep.subr.mxu0 0.0
        %441 = vmatpush1.xpose.msra.mxu0 %v392
        %442 = vmatprep.subr.mxu0 0.0
        %443 = vmatpush1.xpose.msra.mxu0 %v393
        %444 = vmatprep.subr.mxu0 0.0
        %445 = vmatpush1.xpose.msra.mxu0 %v394
        %446 = vmatprep.subr.mxu0 0.0
        %447 = vmatpush1.xpose.msra.mxu0 %v395
        %448 = vmatprep.subr.mxu0 0.0
        %449 = vmatpush1.xpose.msra.mxu0 %v396
        %450 = vmatprep.subr.mxu0 0.0
        %451 = vmatpush1.xpose.msra.mxu0 %v397
        %452 = vmatprep.subr.mxu0 0.0
        %453 = vmatpush1.xpose.msra.mxu0 %v398
        %454 = vmatprep.subr.mxu0 0.0
        %455 = vmatpush1.xpose.msra.mxu0 %v399
        %456 = vmatprep.subr.mxu0 0.0
        %457 = vmatpush1.xpose.msra.mxu0 %v400
        %458 = vmatprep.subr.mxu0 0.0
        %459 = vmatpush1.xpose.msra.mxu0 %v401
        %460 = vmatprep.subr.mxu0 0.0
        %461 = vmatpush1.xpose.msra.mxu0 %v402
        %462 = vmatprep.subr.mxu0 0.0
        %463 = vmatpush1.xpose.msra.mxu0 %v403
        %464 = vmatprep.subr.mxu0 0.0
        %465 = vmatpush1.xpose.msra.mxu0 %v404
        %466 = vmatprep.subr.mxu0 0.0
        %467 = vmatpush1.xpose.msra.mxu0 %v405
        %468 = vmatprep.subr.mxu0 0.0
        %469 = vmatpush1.xpose.msra.mxu0 %v406
        %470 = vmatprep.subr.mxu0 0.0
        %471 = vmatpush1.xpose.msra.mxu0 %v407
        %472 = vmatprep.mubr.f32.mxu0 0.0
        %473 = vmatmul.mubr.f32.gmra.mrb[0].mxu0 %v215
        %v474 = vpop.f32.mrb[0].mxu0
        %v475 = vadd.f32 0.0, %v474
        %v476 = vpop.f32.mrb[0].mxu0
        %v477 = vadd.f32 0.0, %v476
        %478 = vdwg.mxu0
        %479 = vst [vmem:[%s174] sm:$0xff] %v475
        %480 = vst [vmem:[%s174 + $0x8] sm:$0xff] %v477
        %s481 = sand.u32 %s75, 1
        %s482 = scalar_lea.sflag [#allocation4], %s481
        %s483 = sand.u32 %s75, 1
        %s484 = smul.addr %s483, 16
        %s485 = scalar_lea.vmem [#allocation7], %s484
        // Predicated region
        $region37: #{tpu_custom_call.1} parent=27 // pred_check
          %p486 = pneg %p85
        $region38: #{tpu_custom_call.1} parent=27 // pred_check_branch
          %488 = sbr.rel (%p486) target = $region40
        $region39: #{tpu_custom_call.1} parent=27 // pred_region
          %s489 = smul.u32 2, %s20
          %s491 = ssub.s32 256, 256
          %492 = vsyncadd %s482, %s491
          %s493 = smul.addr %s489, 128
          %s494 = scalar_lea.hbm %s2, %s493
          %s496 = sshll.u32 %s485, 4
          %s497 = int_to_ptr.vmem [resolvable:$true] %s496
          %499 = dma.vmem_to_hbm [thread:$0]  %s497, 256, %s494, %s482
        $region40: #{tpu_custom_call.1} parent=27 // pred_fallthru
          _
      $region28: #{tpu_custom_call.1} parent=5 // pred_fallthru
        _
      %p500 = scmp.le.s32.totalorder 2, %s15
      // Predicated region
      $region41: #{tpu_custom_call.1} parent=5 // pred_check
        %p501 = pneg %p500
      $region42: #{tpu_custom_call.1} parent=5 // pred_check_branch
        %503 = sbr.rel (%p501) target = $region44
      $region43: #{tpu_custom_call.1} parent=5 // pred_region
        %s504 = ssub.s32 %s15, 2
        // Predicated region
        $region45: #{tpu_custom_call.1} parent=43 // pred_check
          %p505 = pneg %p91
        $region46: #{tpu_custom_call.1} parent=43 // pred_check_branch
          %507 = sbr.rel (%p505) target = $region48
        $region47: #{tpu_custom_call.1} parent=43 // pred_region
          %s508 = sand.u32 %s76, 1
          %s509 = scalar_lea.sflag [#allocation4], %s508
          %s510 = sand.u32 %s76, 1
          %s511 = smul.addr %s510, 16
          %s512 = scalar_lea.vmem [#allocation7], %s511
          %513 = dma.done %s509, 256
        $region48: #{tpu_custom_call.1} parent=43 // pred_fallthru
          _
      $region44: #{tpu_custom_call.1} parent=5 // pred_fallthru
        _
    $region6: #{tpu_custom_call.1} parent=1 // loop_footer
      %s19 = sadd.s32 1, %s15
    $region7: #{tpu_custom_call.1} parent=1 // loop_footer_branch
      %14 = sbr.rel target = $region3
    $region8: #{tpu_custom_call.1} parent=1 // loop_exit
      _
    %514 = vsyncpa [#allocation3], 1
    %s515 = scalar_lea.sflag [#allocation3], 1
    %516 = vsyncpa %s515, 1
    %517 = vsyncpa [#allocation6], 1
    %s518 = scalar_lea.sflag [#allocation6], 1
    %519 = vsyncpa %s518, 1
    %520 = vsyncpa [#allocation4], 1
    %s521 = scalar_lea.sflag [#allocation4], 1
    %522 = vsyncpa %s521, 1

</llo_original>
